<compile_context>
chip_gen: v7x
topology: tpu7x:2x2x1
jax: 0.10.0
libtpu: 0.0.40
codegen_flags: <defaults>
</compile_context>

<pallas_src>
import math

import jax
import jax.numpy as jnp
from jax.experimental import pallas as pl
from jax.experimental.pallas import tpu as pltpu

# ---- model sizes (small, consistent with the module's __init__) ------------
N_CATEGORIES = 4      # len(all_categories); nonzero so `category` is real data
INPUT_SIZE   = 8
HIDDEN_SIZE  = 32
OUTPUT_SIZE  = 16
BATCH        = 8      # fills all 8 f32 sublanes of a vreg
SEQ_LEN      = 8      # timesteps processed by one kernel launch (=1 also works)

HO   = HIDDEN_SIZE + OUTPUT_SIZE          # 48: o2o fan-in
SLAB = 128                                # lane-dense slab width

# Lane layout of the padded activation slab (chosen so the new hidden produced
# by matmul 1 already sits in the lanes the next step's x expects -> no shift):
#   lanes [ 0:32)  hidden
#   lanes [32:36)  category   (streamed per step)
#   lanes [36:44)  input      (streamed per step)
#   lanes [44:128) zero padding
# Output slab layout: lanes [0:32) new hidden, lanes [32:48) log-probs.
HID_LANE = 0
CAT_LANE = HIDDEN_SIZE                    # 32
IN_LANE  = CAT_LANE + N_CATEGORIES        # 36
OUT_LANE = HIDDEN_SIZE                    # 32 (logit lanes in the output slab)

_BF16 = jnp.bfloat16


def rnn_seq_kernel(seq_ref, w1_ref, w2_ref, b_ref, out_ref, h_ref):
    """One forward() step of the module per grid iteration; hidden in VMEM.

    seq_ref : (1, B, 128) f32  streamed block: lanes [32:36)=category,
                               [36:44)=input; step 0 also carries h0 in [0:32).
    w1_ref  : (128, 128) bf16  fused [i2h | i2o], rows permuted to slab layout.
    w2_ref  : (128, 128) bf16  o2o, output columns at lanes [32:48).
    b_ref   : (8, 128)   f32   row 0 = [b_i2h | b_i2o], row 1 = b_o2o
                               (at lanes [32:48)); rows 2..7 padding.
    out_ref : (1, B, 128) f32  per-step slab: [new hidden | log-probs | 0].
    h_ref   : (B, 128)   f32   VMEM scratch carrying the recurrent hidden
                               (lanes [0:32); other lanes stay zero).
    """
    t = pl.program_id(0)

    @pl.when(t == 0)
    def _init():
        h_ref[...] = jnp.zeros_like(h_ref)

    # x = [hidden | category | input | 0...] with no concat: one VPU add.
    x = seq_ref[0] + h_ref[...]

    # MXU pass 1: fused i2h + i2o (bf16 operands, f32 accumulate) + f32 bias.
    # ho lanes: [0:32) = new hidden, [32:48) = i2o output, [48:128) = 0.
    ho = jnp.dot(x.astype(_BF16), w1_ref[...],
                 preferred_element_type=jnp.float32) + b_ref[0:1, :]

    # MXU pass 2: o2o on [new_hidden | out]; logits land in lanes [32:48).
    full = jnp.dot(ho.astype(_BF16), w2_ref[...],
                   preferred_element_type=jnp.float32) + b_ref[1:2, :]

    # dropout(p=0.1) is identity in eval mode.
    # TODO(synk): training-mode dropout -> pltpu.prng_seed + stateful_bernoulli.

    # LogSoftmax(dim=1) over the 16 logit lanes only.
    col = jax.lax.broadcasted_iota(jnp.int32, full.shape, 1)
    is_logit = jnp.logical_and(col >= OUT_LANE, col < OUT_LANE + OUTPUT_SIZE)
    m = jnp.max(jnp.where(is_logit, full, -jnp.inf), axis=1, keepdims=True)
    shifted = full - m
    p = jnp.where(is_logit, jnp.exp(shifted), 0.0)
    log_probs = shifted - jnp.log(jnp.sum(p, axis=1, keepdims=True))

    # New hidden (exact f32, lanes [0:32)), all other lanes zeroed.
    new_h = jnp.where(col < HIDDEN_SIZE, ho, 0.0)
    h_ref[...] = new_h                                    # carry to next step
    # Single unmasked lane-dense store: [hidden | log-probs | zeros].
    out_ref[0] = jnp.where(is_logit, log_probs, new_h)


def make_params(key):
    """Deterministic init matching nn.Linear's default U(-1/sqrt(fan_in), +)."""
    ks = jax.random.split(key, 6)
    c_in = N_CATEGORIES + INPUT_SIZE + HIDDEN_SIZE           # 44

    def uni(k, shape, fan_in):
        bound = 1.0 / math.sqrt(fan_in)
        return jax.random.uniform(k, shape, jnp.float32, -bound, bound)

    # stored as (in_features, out_features)
    w_i2h = uni(ks[0], (c_in, HIDDEN_SIZE), c_in)
    b_i2h = uni(ks[1], (1, HIDDEN_SIZE), c_in)
    w_i2o = uni(ks[2], (c_in, OUTPUT_SIZE), c_in)
    b_i2o = uni(ks[3], (1, OUTPUT_SIZE), c_in)
    w_o2o = uni(ks[4], (HO, OUTPUT_SIZE), HO)
    b_o2o = uni(ks[5], (1, OUTPUT_SIZE), HO)
    return w_i2h, b_i2h, w_i2o, b_i2o, w_o2o, b_o2o


def fuse_params(params):
    """One-time weight prep: fuse i2h|i2o, permute rows to the slab lane
    layout, pad to (128,128)/(8,128) tiles, cast weights to bf16 (MXU
    operands), keep biases f32 (VPU adds)."""
    w_i2h, b_i2h, w_i2o, b_i2o, w_o2o, b_o2o = params
    ci = N_CATEGORIES + INPUT_SIZE                           # 12

    # Torch fan-in order is [category | input | hidden]; slab order is
    # [hidden | category | input], so permute the rows accordingly.
    w_cat = jnp.concatenate([w_i2h, w_i2o], axis=1)          # (44, 48)
    w1 = jnp.zeros((SLAB, SLAB), jnp.float32)
    w1 = w1.at[HID_LANE:HID_LANE + HIDDEN_SIZE, 0:HO].set(w_cat[ci:, :])
    w1 = w1.at[CAT_LANE:CAT_LANE + ci, 0:HO].set(w_cat[:ci, :])

    # o2o input order is [hidden | output], exactly ho lanes [0:48); its
    # outputs are placed at lanes [32:48) of the output slab.
    w2 = jnp.zeros((SLAB, SLAB), jnp.float32)
    w2 = w2.at[0:HO, OUT_LANE:OUT_LANE + OUTPUT_SIZE].set(w_o2o)

    b = jnp.zeros((8, SLAB), jnp.float32)
    b = b.at[0, 0:HIDDEN_SIZE].set(b_i2h[0])
    b = b.at[0, HIDDEN_SIZE:HO].set(b_i2o[0])
    b = b.at[1, OUT_LANE:OUT_LANE + OUTPUT_SIZE].set(b_o2o[0])
    return w1.astype(_BF16), w2.astype(_BF16), b


@jax.jit
def rnn_forward_seq(category, inputs_seq, hidden0, w1_pad, w2_pad, b_pad):
    """Runs the module's forward() over a whole sequence in ONE pallas_call.

    Returns per-step log-probs (T, B, OUTPUT_SIZE) and per-step new hiddens
    (T, B, HIDDEN_SIZE); hiddens[-1] is the final recurrent state.
    """
    seq_len, batch, _ = inputs_seq.shape

    # One-time layout prep (not per-step): place category/input into their
    # slab lanes; fold the caller's initial hidden into step 0's hidden lanes.
    seq = jnp.zeros((seq_len, batch, SLAB), jnp.float32)
    seq = seq.at[:, :, CAT_LANE:CAT_LANE + N_CATEGORIES].set(
        jnp.broadcast_to(category[None], (seq_len, batch, N_CATEGORIES)))
    seq = seq.at[:, :, IN_LANE:IN_LANE + INPUT_SIZE].set(inputs_seq)
    seq = seq.at[0, :, HID_LANE:HID_LANE + HIDDEN_SIZE].set(hidden0)

    out_slab = pl.pallas_call(
        rnn_seq_kernel,
        out_shape=jax.ShapeDtypeStruct((seq_len, batch, SLAB), jnp.float32),
        grid=(seq_len,),
        in_specs=[
            # per-step activations: streamed, default double-buffered pipeline
            pl.BlockSpec((1, batch, SLAB), lambda t: (t, 0, 0)),
            # weights & biases: constant index_map -> DMA'd once, VMEM-resident
            pl.BlockSpec((SLAB, SLAB), lambda t: (0, 0)),
            pl.BlockSpec((SLAB, SLAB), lambda t: (0, 0)),
            pl.BlockSpec((8, SLAB), lambda t: (0, 0)),
        ],
        out_specs=pl.BlockSpec((1, batch, SLAB), lambda t: (t, 0, 0)),
        scratch_shapes=[pltpu.VMEM((batch, SLAB), jnp.float32)],
        compiler_params=pltpu.CompilerParams(
            dimension_semantics=("arbitrary",),      # sequential recurrence
            vmem_limit_bytes=32 * 1024 * 1024,       # explicit, v7x-safe
        ),
    )(seq, w1_pad, w2_pad, b_pad)

    log_probs = out_slab[:, :, OUT_LANE:OUT_LANE + OUTPUT_SIZE]
    hiddens = out_slab[:, :, HID_LANE:HID_LANE + HIDDEN_SIZE]
    return log_probs, hiddens


def _mxu(a, w):
    # Same arithmetic as the kernel's MXU path: bf16 operands, f32 accumulate.
    return jnp.dot(a.astype(_BF16), w.astype(_BF16),
                   preferred_element_type=jnp.float32)


def reference_step(category, inp, hidden, params):
    """Pure-JAX replica of one forward() call of the PyTorch module (eval)."""
    w_i2h, b_i2h, w_i2o, b_i2o, w_o2o, b_o2o = params
    x = jnp.concatenate([category, inp, hidden], axis=1)
    new_hidden = _mxu(x, w_i2h) + b_i2h
    out = _mxu(x, w_i2o) + b_i2o
    oc = jnp.concatenate([new_hidden, out], axis=1)
    out = _mxu(oc, w_o2o) + b_o2o
    out = jax.nn.log_softmax(out, axis=1)   # dropout(p=0.1) is identity (eval)
    return out, new_hidden


if __name__ == "__main__":
    key = jax.random.PRNGKey(0)
    k_cat, k_inp, k_par = jax.random.split(key, 3)

    category = jax.random.normal(k_cat, (BATCH, N_CATEGORIES), jnp.float32)
    inputs_seq = jax.random.normal(k_inp, (SEQ_LEN, BATCH, INPUT_SIZE), jnp.float32)
    hidden0 = jnp.zeros((BATCH, HIDDEN_SIZE), jnp.float32)   # initHidden()
    params = make_params(k_par)

    w1_pad, w2_pad, b_pad = fuse_params(params)   # one-time weight prep

    log_probs, hiddens = rnn_forward_seq(
        category, inputs_seq, hidden0, w1_pad, w2_pad, b_pad)
    jax.block_until_ready((log_probs, hiddens))

    # Teacher-forced per-step check: feed step t of the reference the hidden
    # the kernel reported for step t-1.  This validates every step's matmuls,
    # biases, log-softmax, lane layout AND the recurrence wiring, while being
    # immune to bf16 rounding-boundary divergence that makes free-running
    # comparisons of two independently-run recurrences non-robust.
    h_in = jnp.concatenate([hidden0[None], hiddens[:-1]], axis=0)  # (T, B, 32)
    ref_out, ref_hid = jax.vmap(
        lambda x_t, h_t: reference_step(category, x_t, h_t, params)
    )(inputs_seq, h_in)

    assert jnp.allclose(log_probs, ref_out, atol=1e-4, rtol=1e-4)
    assert jnp.allclose(hiddens, ref_hid, atol=1e-4, rtol=1e-4)

    print("KERNEL_OK")
</pallas_src>

<mosaic_0001>
module attributes {stable_mosaic.version = 11 : i64} {
  func.func @rnn_seq_kernel(%arg0: i32, %arg1: memref<1x8x128xf32, #tpu.memory_space<vmem>>, %arg2: memref<128x128xbf16, #tpu.memory_space<vmem>>, %arg3: memref<128x128xbf16, #tpu.memory_space<vmem>>, %arg4: memref<8x128xf32, #tpu.memory_space<vmem>>, %arg5: memref<1x8x128xf32, #tpu.memory_space<vmem>>, %arg6: memref<8x128xf32, #tpu.memory_space<vmem>>) attributes {dimension_semantics = [#tpu.dimension_semantics<arbitrary>], iteration_bounds = array<i64: 8>, scalar_prefetch = 0 : i64, scratch_operands = 1 : i64, tpu.core_type = #tpu.core_type<tc>, window_params = [{transform_indices = @transform_0, window_bounds = array<i64: 1, 8, 128>}, {pipeline_mode = #tpu.pipeline_mode<synchronous>, transform_indices = @transform_1, window_bounds = array<i64: 128, 128>}, {pipeline_mode = #tpu.pipeline_mode<synchronous>, transform_indices = @transform_2, window_bounds = array<i64: 128, 128>}, {pipeline_mode = #tpu.pipeline_mode<synchronous>, transform_indices = @transform_3, window_bounds = array<i64: 8, 128>}, {transform_indices = @transform_4, window_bounds = array<i64: 1, 8, 128>}]} {
    %c0_i32 = arith.constant 0 : i32
    %0 = arith.cmpi eq, %arg0, %c0_i32 : i32
    %1 = arith.extui %0 : i1 to i32
    %c0_i32_0 = arith.constant 0 : i32
    %2 = arith.cmpi ne, %1, %c0_i32_0 : i32
    scf.if %2 {
      %cst_24 = arith.constant 0.000000e+00 : f32
      %48 = vector.broadcast %cst_24 : f32 to vector<8x128xf32>
      %c0_25 = arith.constant 0 : index
      %c0_26 = arith.constant 0 : index
      %49 = vector.load %arg6[%c0_25, %c0_26] : memref<8x128xf32, #tpu.memory_space<vmem>>, vector<8x128xf32>
      tpu.vector_store %arg6[%c0_25, %c0_26], %48 {strides = array<i32>} : memref<8x128xf32, #tpu.memory_space<vmem>>, vector<8x128xf32>,
    } else {
    }
    %c0 = arith.constant 0 : index
    %c0_1 = arith.constant 0 : index
    %c0_2 = arith.constant 0 : index
    %3 = vector.load %arg1[%c0, %c0_1, %c0_2] : memref<1x8x128xf32, #tpu.memory_space<vmem>>, vector<1x8x128xf32>
    %4 = vector.shape_cast %3 : vector<1x8x128xf32> to vector<8x128xf32>
    %c0_3 = arith.constant 0 : index
    %c0_4 = arith.constant 0 : index
    %5 = vector.load %arg6[%c0_3, %c0_4] : memref<8x128xf32, #tpu.memory_space<vmem>>, vector<8x128xf32>
    %6 = arith.addf %4, %5 : vector<8x128xf32>
    %7 = arith.truncf %6 : vector<8x128xf32> to vector<8x128xbf16>
    %c0_5 = arith.constant 0 : index
    %c0_6 = arith.constant 0 : index
    %8 = vector.load %arg2[%c0_5, %c0_6] : memref<128x128xbf16, #tpu.memory_space<vmem>>, vector<128x128xbf16>
    %cst = arith.constant dense<0.000000e+00> : vector<8x128xf32>
    %9 = tpu.matmul %7, %8, %cst {dimension_numbers = #tpu.dot_dimension_numbers<[1], [0], [0], [1], [0, 0, 1, 1], [], []>} : vector<8x128xbf16>, vector<128x128xbf16>, vector<8x128xf32> -> vector<8x128xf32>
    %c0_7 = arith.constant 0 : index
    %c0_8 = arith.constant 0 : index
    %10 = vector.load %arg4[%c0_7, %c0_8] : memref<8x128xf32, #tpu.memory_space<vmem>>, vector<1x128xf32>
    %11 = vector.broadcast %10 : vector<1x128xf32> to vector<8x128xf32>
    %12 = arith.addf %9, %11 : vector<8x128xf32>
    %13 = arith.truncf %12 : vector<8x128xf32> to vector<8x128xbf16>
    %c0_9 = arith.constant 0 : index
    %c0_10 = arith.constant 0 : index
    %14 = vector.load %arg3[%c0_9, %c0_10] : memref<128x128xbf16, #tpu.memory_space<vmem>>, vector<128x128xbf16>
    %cst_11 = arith.constant dense<0.000000e+00> : vector<8x128xf32>
    %15 = tpu.matmul %13, %14, %cst_11 {dimension_numbers = #tpu.dot_dimension_numbers<[1], [0], [0], [1], [0, 0, 1, 1], [], []>} : vector<8x128xbf16>, vector<128x128xbf16>, vector<8x128xf32> -> vector<8x128xf32>
    %c1 = arith.constant 1 : index
    %c0_12 = arith.constant 0 : index
    %16 = vector.load %arg4[%c1, %c0_12] : memref<8x128xf32, #tpu.memory_space<vmem>>, vector<1x128xf32>
    %17 = vector.broadcast %16 : vector<1x128xf32> to vector<8x128xf32>
    %18 = arith.addf %15, %17 : vector<8x128xf32>
    %19 = tpu.iota {dimensions = array<i32: 1>} : vector<8x128xi32>
    %c32_i32 = arith.constant 32 : i32
    %20 = vector.broadcast %c32_i32 : i32 to vector<8x128xi32>
    %21 = arith.cmpi sge, %19, %20 : vector<8x128xi32>
    %c48_i32 = arith.constant 48 : i32
    %22 = vector.broadcast %c48_i32 : i32 to vector<8x128xi32>
    %23 = arith.cmpi slt, %19, %22 : vector<8x128xi32>
    %24 = arith.andi %21, %23 : vector<8x128xi1>
    %cst_13 = arith.constant 0xFF800000 : f32
    %25 = vector.broadcast %cst_13 : f32 to vector<8x128xf32>
    %26 = arith.select %24, %18, %25 : vector<8x128xi1>, vector<8x128xf32>
    %cst_14 = arith.constant dense<0xFF800000> : vector<8xf32>
    %27 = vector.multi_reduction <maximumf>, %26, %cst_14 [1] : vector<8x128xf32> to vector<8xf32>
    %28 = vector.shape_cast %27 : vector<8xf32> to vector<8x1xf32>
    %29 = vector.broadcast %28 : vector<8x1xf32> to vector<8x128xf32>
    %30 = arith.subf %18, %29 : vector<8x128xf32>
    %31 = math.exp %30 : vector<8x128xf32>
    %cst_15 = arith.constant 0.000000e+00 : f32
    %32 = vector.broadcast %cst_15 : f32 to vector<8x128xf32>
    %33 = arith.select %24, %31, %32 : vector<8x128xi1>, vector<8x128xf32>
    %cst_16 = arith.constant dense<0.000000e+00> : vector<8xf32>
    %34 = vector.multi_reduction <add>, %33, %cst_16 [1] : vector<8x128xf32> to vector<8xf32>
    %35 = vector.shape_cast %34 : vector<8xf32> to vector<8x1xf32>
    %36 = math.log %35 : vector<8x1xf32>
    %37 = vector.broadcast %36 : vector<8x1xf32> to vector<8x128xf32>
    %38 = arith.subf %30, %37 : vector<8x128xf32>
    %c32_i32_17 = arith.constant 32 : i32
    %39 = vector.broadcast %c32_i32_17 : i32 to vector<8x128xi32>
    %40 = arith.cmpi slt, %19, %39 : vector<8x128xi32>
    %cst_18 = arith.constant 0.000000e+00 : f32
    %41 = vector.broadcast %cst_18 : f32 to vector<8x128xf32>
    %42 = arith.select %40, %12, %41 : vector<8x128xi1>, vector<8x128xf32>
    %c0_19 = arith.constant 0 : index
    %c0_20 = arith.constant 0 : index
    %43 = vector.load %arg6[%c0_19, %c0_20] : memref<8x128xf32, #tpu.memory_space<vmem>>, vector<8x128xf32>
    tpu.vector_store %arg6[%c0_19, %c0_20], %42 {strides = array<i32>} : memref<8x128xf32, #tpu.memory_space<vmem>>, vector<8x128xf32>,
    %44 = arith.select %24, %38, %42 : vector<8x128xi1>, vector<8x128xf32>
    %c0_21 = arith.constant 0 : index
    %c0_22 = arith.constant 0 : index
    %c0_23 = arith.constant 0 : index
    %45 = vector.load %arg5[%c0_21, %c0_22, %c0_23] : memref<1x8x128xf32, #tpu.memory_space<vmem>>, vector<1x8x128xf32>
    %46 = vector.shape_cast %45 : vector<1x8x128xf32> to vector<8x128xf32>
    %47 = vector.shape_cast %44 : vector<8x128xf32> to vector<1x8x128xf32>
    tpu.vector_store %arg5[%c0_21, %c0_22, %c0_23], %47 {strides = array<i32>} : memref<1x8x128xf32, #tpu.memory_space<vmem>>, vector<1x8x128xf32>,
    return
  }
  func.func @transform_0(%arg0: i32) -> (i32, i32, i32) {
    %c0_i32 = arith.constant 0 : i32
    %c0_i32_0 = arith.constant 0 : i32
    %c0_i32_1 = arith.constant 0 : i32
    return %arg0, %c0_i32, %c0_i32_0 : i32, i32, i32
  }
  func.func @transform_1(%arg0: i32) -> (i32, i32) {
    %c0_i32 = arith.constant 0 : i32
    %c0_i32_0 = arith.constant 0 : i32
    %c0_i32_1 = arith.constant 0 : i32
    return %c0_i32, %c0_i32_0 : i32, i32
  }
  func.func @transform_2(%arg0: i32) -> (i32, i32) {
    %c0_i32 = arith.constant 0 : i32
    %c0_i32_0 = arith.constant 0 : i32
    %c0_i32_1 = arith.constant 0 : i32
    return %c0_i32, %c0_i32_0 : i32, i32
  }
  func.func @transform_3(%arg0: i32) -> (i32, i32) {
    %c0_i32 = arith.constant 0 : i32
    %c0_i32_0 = arith.constant 0 : i32
    %c0_i32_1 = arith.constant 0 : i32
    return %c0_i32, %c0_i32_0 : i32, i32
  }
  func.func @transform_4(%arg0: i32) -> (i32, i32, i32) {
    %c0_i32 = arith.constant 0 : i32
    %c0_i32_0 = arith.constant 0 : i32
    %c0_i32_1 = arith.constant 0 : i32
    return %arg0, %c0_i32, %c0_i32_0 : i32, i32, i32
  }
}

</mosaic_0001>

<llo_original>
// kernel: rnn_forward_seq.1
$region0: #{rnn_forward_seq.1}
  #allocation0 [shape = 'u32[]', space=smem, size = 0x4, offset = 0x4, fixed_abs, tag = 'smem constant byte address 0x4 - core index']
  #allocation1 [shape = 'u32[144,128]{1,0:T(1,128)}', space=vmem, size = 0x12000, scoped, tag = 'internal scratch']
  #allocation2 [shape = 'f32[8,128]{1,0:T(8,128)}', space=vmem, size = 0x1000, scoped, tag = 'scratch operand']
  %s0 = inlined_call_operand.vmem [shape: f32[8,8,128], index: 0, kind: input, shape index: {}]
  %s1 = inlined_call_operand.vmem [shape: bf16[128,128], index: 1, kind: input, shape index: {}]
  %s2 = inlined_call_operand.vmem [shape: bf16[128,128], index: 2, kind: input, shape index: {}]
  %s3 = inlined_call_operand.vmem [shape: f32[8,128], index: 3, kind: input, shape index: {}]
  %s4 = inlined_call_operand.vmem [shape: f32[8,8,128], index: 4, kind: output, shape index: {}]
  %s5 = sld [smem:[#allocation0]]
  $region53: #{rnn_forward_seq.1} parent=0
    _
  %s7 = ssub.s32 1, %s5
  %s8 = scalar_select 0, %s7, %s5
  loop: start=0, step=1, limit=10
  $region2: #{rnn_forward_seq.1} parent=0 // loop_pre_header
    _
  $region3: #{rnn_forward_seq.1} parent=0 // loop_header
    %s10 = sphi 0, %s14
    %p11 = scmp.ge.s32.totalorder %s10, 10
    %s20 = sphi 0, %s22
    %s23 = sphi 0, %s20
    %s24 = sphi 0, %s23
    %s40 = sphi 0, %s24
    %s44 = sphi 0, %s44
    %s46 = sphi 0, %s44
    %s47 = sphi 0, %s46
    %s61 = sphi 0, %s47
    %s65 = sphi 0, %s65
    %s67 = sphi 0, %s65
    %s68 = sphi 0, %s67
    %s82 = sphi 0, %s68
    %s86 = sphi 0, %s86
    %s88 = sphi 0, %s86
    %s89 = sphi 0, %s88
    %s103 = sphi 0, %s89
    %s109 = sphi 0, %s111
    %s112 = sphi 0, %s109
    %s113 = sphi 0, %s112
    %s129 = sphi 0, %s113
  $region4: #{rnn_forward_seq.1} parent=0 // loop_header_branch
    %13 = sbr.rel (%p11) target = $region8
  $region5: #{rnn_forward_seq.1} parent=0 // loop_body
    %s15 = ssub.s32 %s10, 1
    %s16 = ssub.s32 %s10, 2
    %s17 = sadd.s32 %s10, 1
    %s18 = ssub.s32 %s10, %s17
    %p19 = scmp.eq.s32.totalorder %s18, 0
    %s21 = sadd.s32 %s20, 1
    %s22 = scalar_select %p19, %s20, %s21
    %p25 = pneg %p19
    %p26 = scmp.eq.s32.totalorder %s10, 7
    %p27 = por %p25, %p26
    %p28 = scmp.ne.s32.totalorder %s20, %s23
    %p29 = scmp.eq.s32.totalorder %s10, 0
    %p30 = por %p28, %p29
    %p31 = scmp.ne.s32.totalorder %s20, %s23
    %p32 = scmp.eq.s32.totalorder %s15, 7
    %p33 = por %p31, %p32
    %p34 = scmp.ne.s32.totalorder %s23, %s24
    %p35 = scmp.eq.s32.totalorder %s15, 0
    %p36 = por %p34, %p35
    %p37 = scmp.ne.s32.totalorder %s23, %s24
    %p38 = scmp.eq.s32.totalorder %s16, 7
    %p39 = por %p37, %p38
    %p41 = scmp.ne.s32.totalorder %s24, %s40
    %p42 = scmp.eq.s32.totalorder %s16, 0
    %p43 = por %p41, %p42
    %s45 = sadd.s32 %s44, 1
    %p48 = scmp.eq.s32.totalorder %s10, 7
    %p49 = scmp.ne.s32.totalorder %s44, %s46
    %p50 = scmp.eq.s32.totalorder %s10, 0
    %p51 = por %p49, %p50
    %p52 = scmp.ne.s32.totalorder %s44, %s46
    %p53 = scmp.eq.s32.totalorder %s15, 7
    %p54 = por %p52, %p53
    %p55 = scmp.ne.s32.totalorder %s46, %s47
    %p56 = scmp.eq.s32.totalorder %s15, 0
    %p57 = por %p55, %p56
    %p58 = scmp.ne.s32.totalorder %s46, %s47
    %p59 = scmp.eq.s32.totalorder %s16, 7
    %p60 = por %p58, %p59
    %p62 = scmp.ne.s32.totalorder %s47, %s61
    %p63 = scmp.eq.s32.totalorder %s16, 0
    %p64 = por %p62, %p63
    %s66 = sadd.s32 %s65, 1
    %p69 = scmp.eq.s32.totalorder %s10, 7
    %p70 = scmp.ne.s32.totalorder %s65, %s67
    %p71 = scmp.eq.s32.totalorder %s10, 0
    %p72 = por %p70, %p71
    %p73 = scmp.ne.s32.totalorder %s65, %s67
    %p74 = scmp.eq.s32.totalorder %s15, 7
    %p75 = por %p73, %p74
    %p76 = scmp.ne.s32.totalorder %s67, %s68
    %p77 = scmp.eq.s32.totalorder %s15, 0
    %p78 = por %p76, %p77
    %p79 = scmp.ne.s32.totalorder %s67, %s68
    %p80 = scmp.eq.s32.totalorder %s16, 7
    %p81 = por %p79, %p80
    %p83 = scmp.ne.s32.totalorder %s68, %s82
    %p84 = scmp.eq.s32.totalorder %s16, 0
    %p85 = por %p83, %p84
    %s87 = sadd.s32 %s86, 1
    %p90 = scmp.eq.s32.totalorder %s10, 7
    %p91 = scmp.ne.s32.totalorder %s86, %s88
    %p92 = scmp.eq.s32.totalorder %s10, 0
    %p93 = por %p91, %p92
    %p94 = scmp.ne.s32.totalorder %s86, %s88
    %p95 = scmp.eq.s32.totalorder %s15, 7
    %p96 = por %p94, %p95
    %p97 = scmp.ne.s32.totalorder %s88, %s89
    %p98 = scmp.eq.s32.totalorder %s15, 0
    %p99 = por %p97, %p98
    %p100 = scmp.ne.s32.totalorder %s88, %s89
    %p101 = scmp.eq.s32.totalorder %s16, 7
    %p102 = por %p100, %p101
    %p104 = scmp.ne.s32.totalorder %s89, %s103
    %p105 = scmp.eq.s32.totalorder %s16, 0
    %p106 = por %p104, %p105
    %s107 = ssub.s32 %s10, %s17
    %p108 = scmp.eq.s32.totalorder %s107, 0
    %s110 = sadd.s32 %s109, 1
    %s111 = scalar_select %p108, %s109, %s110
    %p114 = pneg %p108
    %p115 = scmp.eq.s32.totalorder %s10, 7
    %p116 = por %p114, %p115
    %p117 = scmp.ne.s32.totalorder %s109, %s112
    %p118 = scmp.eq.s32.totalorder %s10, 0
    %p119 = por %p117, %p118
    %p120 = scmp.ne.s32.totalorder %s109, %s112
    %p121 = scmp.eq.s32.totalorder %s15, 7
    %p122 = por %p120, %p121
    %p123 = scmp.ne.s32.totalorder %s112, %s113
    %p124 = scmp.eq.s32.totalorder %s15, 0
    %p125 = por %p123, %p124
    %p126 = scmp.ne.s32.totalorder %s112, %s113
    %p127 = scmp.eq.s32.totalorder %s16, 7
    %p128 = por %p126, %p127
    %p130 = scmp.ne.s32.totalorder %s113, %s129
    %p131 = scmp.eq.s32.totalorder %s16, 0
    %p132 = por %p130, %p131
    %p133 = scmp.le.s32.totalorder 1, %s10
    %p134 = scmp.lt.s32.totalorder %s10, 9
    %p135 = pnand %p133, %p134
    %p136 = pneg %p135
    // Predicated region
    $region9: #{rnn_forward_seq.1} parent=5 // pred_check
      _
    $region10: #{rnn_forward_seq.1} parent=5 // pred_check_branch
      %138 = sbr.rel (%p135) target = $region12
    $region11: #{rnn_forward_seq.1} parent=5 // pred_region
      %s139 = ssub.s32 %s10, 1
      // Predicated region
      $region13: #{rnn_forward_seq.1} parent=11 // pred_check
        %p140 = pneg %p57
      $region14: #{rnn_forward_seq.1} parent=11 // pred_check_branch
        %142 = sbr.rel (%p140) target = $region16
      $region15: #{rnn_forward_seq.1} parent=11 // pred_region
        _
      $region16: #{rnn_forward_seq.1} parent=11 // pred_fallthru
        _
      // Predicated region
      $region17: #{rnn_forward_seq.1} parent=11 // pred_check
        %p143 = pneg %p78
      $region18: #{rnn_forward_seq.1} parent=11 // pred_check_branch
        %145 = sbr.rel (%p143) target = $region20
      $region19: #{rnn_forward_seq.1} parent=11 // pred_region
        _
      $region20: #{rnn_forward_seq.1} parent=11 // pred_fallthru
        _
      // Predicated region
      $region21: #{rnn_forward_seq.1} parent=11 // pred_check
        %p146 = pneg %p99
      $region22: #{rnn_forward_seq.1} parent=11 // pred_check_branch
        %148 = sbr.rel (%p146) target = $region24
      $region23: #{rnn_forward_seq.1} parent=11 // pred_region
        _
      $region24: #{rnn_forward_seq.1} parent=11 // pred_fallthru
        _
    $region12: #{rnn_forward_seq.1} parent=5 // pred_fallthru
      _
    %p149 = scmp.lt.s32.totalorder %s10, 8
    // Predicated region
    $region25: #{rnn_forward_seq.1} parent=5 // pred_check
      %p150 = pneg %p149
    $region26: #{rnn_forward_seq.1} parent=5 // pred_check_branch
      %152 = sbr.rel (%p150) target = $region28
    $region27: #{rnn_forward_seq.1} parent=5 // pred_region
      // Predicated region
      $region29: #{rnn_forward_seq.1} parent=27 // pred_check
        %p153 = pneg %p30
      $region30: #{rnn_forward_seq.1} parent=27 // pred_check_branch
        %155 = sbr.rel (%p153) target = $region32
      $region31: #{rnn_forward_seq.1} parent=27 // pred_region
        %p156 = scmp.lt.s32.totalorder %s10, 7
        %s157 = scalar_select %p156, %s10, 7
        %s158 = smul.addr %s157, 8
        %s159 = scalar_lea.vmem %s0, %s158
      $region32: #{rnn_forward_seq.1} parent=27 // pred_fallthru
        _
    $region28: #{rnn_forward_seq.1} parent=5 // pred_fallthru
      _
    %p160 = scmp.le.s32.totalorder 1, %s10
    %p161 = scmp.lt.s32.totalorder %s10, 9
    %p162 = pnand %p160, %p161
    %p163 = pneg %p162
    // Predicated region
    $region33: #{rnn_forward_seq.1} parent=5 // pred_check
      _
    $region34: #{rnn_forward_seq.1} parent=5 // pred_check_branch
      %165 = sbr.rel (%p162) target = $region36
    $region35: #{rnn_forward_seq.1} parent=5 // pred_region
      %s166 = ssub.s32 %s10, 1
      %p167 = scmp.lt.s32.totalorder %s15, 7
      %s168 = scalar_select %p167, %s15, 7
      %s169 = smul.addr %s168, 8
      %s170 = scalar_lea.vmem %s0, %s169
      %p171 = pneg %p36
      %p172 = pneg %p33
      %p173 = pneg %p57
      %p174 = pneg %p54
      %p175 = pneg %p78
      %p176 = pneg %p75
      %p177 = pneg %p99
      %p178 = pneg %p96
      %p179 = pneg %p125
      %p180 = pneg %p122
      %p181 = scmp.lt.s32.totalorder %s15, 7
      %s182 = scalar_select %p181, %s15, 7
      %s183 = smul.addr %s182, 8
      %s184 = scalar_lea.vmem %s4, %s183
      %p185 = scmp.lt.s32.totalorder %s15, 7
      %s186 = scalar_select %p185, %s15, 7
      %s187 = smul.addr %s186, 8
      %s188 = scalar_lea.vmem %s0, %s187
      %p189 = scmp.lt.s32.totalorder %s15, 7
      %s190 = scalar_select %p189, %s15, 7
      %s191 = smul.addr %s190, 8
      %s192 = scalar_lea.vmem %s4, %s191
      %p194 = scmp.eq.s32.totalorder %s15, 0
      // Predicated region
      $region37: #{rnn_forward_seq.1} parent=35 // pred_check
        %p195 = pneg %p194
      $region38: #{rnn_forward_seq.1} parent=35 // pred_check_branch
        %197 = sbr.rel (%p195) target = $region40
      $region39: #{rnn_forward_seq.1} parent=35 // pred_region
        %198 = vst [vmem:[#allocation2] sm:$0xff] 0.0
      $region40: #{rnn_forward_seq.1} parent=35 // pred_fallthru
        _
      %v199 = vld [vmem:[%s188] sm:$0xff]
      %v200 = vld [vmem:[#allocation2] sm:$0xff]
      %v201 = vadd.f32 %v199, %v200
      %v202 = vpack.c.bf16 %v201, %v201
      %v203 = vld [vmem:[%s1] sm:$0xf]
      %v204 = vld [vmem:[%s1 + $0x4] sm:$0xf]
      %v205 = vld [vmem:[%s1 + $0x8] sm:$0xf]
      %v206 = vld [vmem:[%s1 + $0xc] sm:$0xf]
      %v207 = vld [vmem:[%s1 + $0x10] sm:$0xf]
      %v208 = vld [vmem:[%s1 + $0x14] sm:$0xf]
      %v209 = vld [vmem:[%s1 + $0x18] sm:$0xf]
      %v210 = vld [vmem:[%s1 + $0x1c] sm:$0xf]
      %v211 = vld [vmem:[%s1 + $0x20] sm:$0xf]
      %v212 = vld [vmem:[%s1 + $0x24] sm:$0xf]
      %v213 = vld [vmem:[%s1 + $0x28] sm:$0xf]
      %v214 = vld [vmem:[%s1 + $0x2c] sm:$0xf]
      %v215 = vld [vmem:[%s1 + $0x30] sm:$0xf]
      %v216 = vld [vmem:[%s1 + $0x34] sm:$0xf]
      %v217 = vld [vmem:[%s1 + $0x38] sm:$0xf]
      %v218 = vld [vmem:[%s1 + $0x3c] sm:$0xf]
      %v219 = vld [vmem:[%s3] sm:$0x1]
      %v220 = vlaneseq
      %v221 = vshrl.u32 %v220, 7
      %v222 = vsub.s32 0, %v221
      %v223 = vrot.slane %v219, %v222
      %v240 = vunpack.c.l.b16 %v203
      %v241 = vunpack.c.l.b16 %v204
      %v242 = vunpack.c.l.b16 %v205
      %v243 = vunpack.c.l.b16 %v206
      %v244 = vunpack.c.l.b16 %v207
      %v245 = vunpack.c.l.b16 %v208
      %v246 = vunpack.c.l.b16 %v209
      %v247 = vunpack.c.l.b16 %v210
      %v248 = vunpack.c.l.b16 %v211
      %v249 = vunpack.c.l.b16 %v212
      %v250 = vunpack.c.l.b16 %v213
      %v251 = vunpack.c.l.b16 %v214
      %v252 = vunpack.c.l.b16 %v215
      %v253 = vunpack.c.l.b16 %v216
      %v254 = vunpack.c.l.b16 %v217
      %v255 = vunpack.c.l.b16 %v218
      %v256 = vpack.c.b16 %v241, %v240
      %v257 = vpack.c.b16 %v243, %v242
      %v258 = vpack.c.b16 %v245, %v244
      %v259 = vpack.c.b16 %v247, %v246
      %v260 = vpack.c.b16 %v249, %v248
      %v261 = vpack.c.b16 %v251, %v250
      %v262 = vpack.c.b16 %v253, %v252
      %v263 = vpack.c.b16 %v255, %v254
      %272 = vmatprep.subr.bf16.mxu0 0
      %273 = vmatpush1.bf16.msra.mxu0 %v256
      %274 = vmatprep.subr.bf16.mxu0 0
      %275 = vmatpush1.bf16.msra.mxu0 %v257
      %276 = vmatprep.subr.bf16.mxu0 0
      %277 = vmatpush1.bf16.msra.mxu0 %v258
      %278 = vmatprep.subr.bf16.mxu0 0
      %279 = vmatpush1.bf16.msra.mxu0 %v259
      %280 = vmatprep.subr.bf16.mxu0 0
      %281 = vmatpush1.bf16.msra.mxu0 %v260
      %282 = vmatprep.subr.bf16.mxu0 0
      %283 = vmatpush1.bf16.msra.mxu0 %v261
      %284 = vmatprep.subr.bf16.mxu0 0
      %285 = vmatpush1.bf16.msra.mxu0 %v262
      %286 = vmatprep.subr.bf16.mxu0 0
      %287 = vmatpush1.bf16.msra.mxu0 %v263
      %288 = vmatprep.subr.bf16.mxu0 0
      %289 = vmatpush1.bf16.msra.mxu0 0
      %290 = vmatprep.subr.bf16.mxu0 0
      %291 = vmatpush1.bf16.msra.mxu0 0
      %292 = vmatprep.subr.bf16.mxu0 0
      %293 = vmatpush1.bf16.msra.mxu0 0
      %294 = vmatprep.subr.bf16.mxu0 0
      %295 = vmatpush1.bf16.msra.mxu0 0
      %296 = vmatprep.subr.bf16.mxu0 0
      %297 = vmatpush1.bf16.msra.mxu0 0
      %298 = vmatprep.subr.bf16.mxu0 0
      %299 = vmatpush1.bf16.msra.mxu0 0
      %300 = vmatprep.subr.bf16.mxu0 0
      %301 = vmatpush1.bf16.msra.mxu0 0
      %302 = vmatprep.subr.bf16.mxu0 0
      %303 = vmatpush1.bf16.msra.mxu0 0
      %304 = vmatprep.mubr.bf16.mxu0 0
      %305 = vmatmul.mubr.bf16.gmra.mrb[0].mxu0 %v202
      %v306 = vpop.f32.mrb[0].mxu0
      %v307 = vadd.f32 %v223, %v306
      %v308 = vpop.f32.mrb[0].mxu0
      %v309 = vpop.f32.mrb[0].mxu0
      %v310 = vpop.f32.mrb[0].mxu0
      %311 = vdwg.mxu0
      %v312 = vpack.c.bf16 %v307, %v307
      %v313 = vld [vmem:[%s2] sm:$0xf]
      %v314 = vld [vmem:[%s2 + $0x4] sm:$0xf]
      %v315 = vld [vmem:[%s2 + $0x8] sm:$0xf]
      %v316 = vld [vmem:[%s2 + $0xc] sm:$0xf]
      %v317 = vld [vmem:[%s2 + $0x10] sm:$0xf]
      %v318 = vld [vmem:[%s2 + $0x14] sm:$0xf]
      %v319 = vld [vmem:[%s2 + $0x18] sm:$0xf]
      %v320 = vld [vmem:[%s2 + $0x1c] sm:$0xf]
      %v321 = vld [vmem:[%s2 + $0x20] sm:$0xf]
      %v322 = vld [vmem:[%s2 + $0x24] sm:$0xf]
      %v323 = vld [vmem:[%s2 + $0x28] sm:$0xf]
      %v324 = vld [vmem:[%s2 + $0x2c] sm:$0xf]
      %v325 = vld [vmem:[%s2 + $0x30] sm:$0xf]
      %v326 = vld [vmem:[%s2 + $0x34] sm:$0xf]
      %v327 = vld [vmem:[%s2 + $0x38] sm:$0xf]
      %v328 = vld [vmem:[%s2 + $0x3c] sm:$0xf]
      %v329 = vld [vmem:[%s3 + $0x1] sm:$0x1]
      %v330 = vlaneseq
      %v331 = vshrl.u32 %v330, 7
      %v332 = vsub.s32 0, %v331
      %v333 = vrot.slane %v329, %v332
      %v350 = vunpack.c.l.b16 %v313
      %v351 = vunpack.c.l.b16 %v314
      %v352 = vunpack.c.l.b16 %v315
      %v353 = vunpack.c.l.b16 %v316
      %v354 = vunpack.c.l.b16 %v317
      %v355 = vunpack.c.l.b16 %v318
      %v356 = vunpack.c.l.b16 %v319
      %v357 = vunpack.c.l.b16 %v320
      %v358 = vunpack.c.l.b16 %v321
      %v359 = vunpack.c.l.b16 %v322
      %v360 = vunpack.c.l.b16 %v323
      %v361 = vunpack.c.l.b16 %v324
      %v362 = vunpack.c.l.b16 %v325
      %v363 = vunpack.c.l.b16 %v326
      %v364 = vunpack.c.l.b16 %v327
      %v365 = vunpack.c.l.b16 %v328
      %v366 = vpack.c.b16 %v351, %v350
      %v367 = vpack.c.b16 %v353, %v352
      %v368 = vpack.c.b16 %v355, %v354
      %v369 = vpack.c.b16 %v357, %v356
      %v370 = vpack.c.b16 %v359, %v358
      %v371 = vpack.c.b16 %v361, %v360
      %v372 = vpack.c.b16 %v363, %v362
      %v373 = vpack.c.b16 %v365, %v364
      %382 = vmatprep.subr.bf16.mxu0 0
      %383 = vmatpush1.bf16.msra.mxu0 %v366
      %384 = vmatprep.subr.bf16.mxu0 0
      %385 = vmatpush1.bf16.msra.mxu0 %v367
      %386 = vmatprep.subr.bf16.mxu0 0
      %387 = vmatpush1.bf16.msra.mxu0 %v368
      %388 = vmatprep.subr.bf16.mxu0 0
      %389 = vmatpush1.bf16.msra.mxu0 %v369
      %390 = vmatprep.subr.bf16.mxu0 0
      %391 = vmatpush1.bf16.msra.mxu0 %v370
      %392 = vmatprep.subr.bf16.mxu0 0
      %393 = vmatpush1.bf16.msra.mxu0 %v371
      %394 = vmatprep.subr.bf16.mxu0 0
      %395 = vmatpush1.bf16.msra.mxu0 %v372
      %396 = vmatprep.subr.bf16.mxu0 0
      %397 = vmatpush1.bf16.msra.mxu0 %v373
      %398 = vmatprep.subr.bf16.mxu0 0
      %399 = vmatpush1.bf16.msra.mxu0 0
      %400 = vmatprep.subr.bf16.mxu0 0
      %401 = vmatpush1.bf16.msra.mxu0 0
      %402 = vmatprep.subr.bf16.mxu0 0
      %403 = vmatpush1.bf16.msra.mxu0 0
      %404 = vmatprep.subr.bf16.mxu0 0
      %405 = vmatpush1.bf16.msra.mxu0 0
      %406 = vmatprep.subr.bf16.mxu0 0
      %407 = vmatpush1.bf16.msra.mxu0 0
      %408 = vmatprep.subr.bf16.mxu0 0
      %409 = vmatpush1.bf16.msra.mxu0 0
      %410 = vmatprep.subr.bf16.mxu0 0
      %411 = vmatpush1.bf16.msra.mxu0 0
      %412 = vmatprep.subr.bf16.mxu0 0
      %413 = vmatpush1.bf16.msra.mxu0 0
      %414 = vmatprep.mubr.bf16.mxu0 0
      %415 = vmatmul.mubr.bf16.gmra.mrb[0].mxu0 %v312
      %v416 = vpop.f32.mrb[0].mxu0
      %v417 = vadd.f32 %v333, %v416
      %v418 = vpop.f32.mrb[0].mxu0
      %v419 = vpop.f32.mrb[0].mxu0
      %v420 = vpop.f32.mrb[0].mxu0
      %421 = vdwg.mxu0
      %v422 = vlaneseq
      %v423 = vand.u32 %v422, 127
      %vm424 = vcmp.ge.s32.totalorder %v423, 32
      %vm425 = vcmp.lt.s32.totalorder %v423, 48
      %vm426 = vmand %vm424, %vm425
      %v427 = vsel %vm426, %v417, -inf
      %428 = vmax.xlane.f32.xlu0 %v427
      %v429 = vpop.xlane.xlu0 %428
      %v430 = vsub.f32 %v417, %v429
      %v431 = vmul.f32 %v430, 1.442695
      %v432 = vpow.pop %v431
      %v433 = vsel %vm426, %v432, 0.0
      %434 = vadd.xlane.f32.xlu0 %v433
      %v435 = vpop.xlane.xlu0 %434
      %v436 = vlog2.pop %v435
      %v437 = vmul.f32 %v436, 0.6931472
      %v438 = vsub.f32 %v430, %v437
      %vm439 = vcmp.lt.s32.totalorder %v423, 32
      %v440 = vsel %vm439, %v307, 0.0
      %441 = vst [vmem:[#allocation2] sm:$0xff] %v440
      %v442 = vsel %vm426, %v438, %v440
      %443 = vst [vmem:[%s192] sm:$0xff] %v442
      %p444 = scmp.lt.s32.totalorder %s15, 7
      %s445 = scalar_select %p444, %s15, 7
      %s446 = smul.addr %s445, 8
      %s447 = scalar_lea.vmem %s4, %s446
      // Predicated region
      $region41: #{rnn_forward_seq.1} parent=35 // pred_check
        %p448 = pneg %p122
      $region42: #{rnn_forward_seq.1} parent=35 // pred_check_branch
        %450 = sbr.rel (%p448) target = $region44
      $region43: #{rnn_forward_seq.1} parent=35 // pred_region
        _
      $region44: #{rnn_forward_seq.1} parent=35 // pred_fallthru
        _
    $region36: #{rnn_forward_seq.1} parent=5 // pred_fallthru
      _
    %p451 = scmp.le.s32.totalorder 2, %s10
    // Predicated region
    $region45: #{rnn_forward_seq.1} parent=5 // pred_check
      %p452 = pneg %p451
    $region46: #{rnn_forward_seq.1} parent=5 // pred_check_branch
      %454 = sbr.rel (%p452) target = $region48
    $region47: #{rnn_forward_seq.1} parent=5 // pred_region
      %s455 = ssub.s32 %s10, 2
      // Predicated region
      $region49: #{rnn_forward_seq.1} parent=47 // pred_check
        %p456 = pneg %p128
      $region50: #{rnn_forward_seq.1} parent=47 // pred_check_branch
        %458 = sbr.rel (%p456) target = $region52
      $region51: #{rnn_forward_seq.1} parent=47 // pred_region
        %p459 = scmp.lt.s32.totalorder %s16, 7
        %s460 = scalar_select %p459, %s16, 7
        %s461 = smul.addr %s460, 8
        %s462 = scalar_lea.vmem %s4, %s461
      $region52: #{rnn_forward_seq.1} parent=47 // pred_fallthru
        _
    $region48: #{rnn_forward_seq.1} parent=5 // pred_fallthru
      _
  $region6: #{rnn_forward_seq.1} parent=0 // loop_footer
    %s14 = sadd.s32 1, %s10
  $region7: #{rnn_forward_seq.1} parent=0 // loop_footer_branch
    %9 = sbr.rel target = $region3
  $region8: #{rnn_forward_seq.1} parent=0 // loop_exit
    _

</llo_original>
